<compile_context>
chip_gen: v7x
topology: tpu7x:2x2x1
jax: 0.10.0
libtpu: 0.0.40
codegen_flags: <defaults>
</compile_context>

<pallas_src>
import math

import jax
import jax.numpy as jnp
from jax.experimental import pallas as pl
from jax.experimental.pallas import tpu as pltpu


def _dropout_mul_kernel(x_ref, noise_ref, o_ref):
    # x_ref / o_ref : (1, tm, W) lane-dense row block of the flattened activations
    # noise_ref     : (1, 1, W)  per-batch dropout scales, tiled to width W
    o_ref[...] = x_ref[...] * noise_ref[...]


def _pick_row_width(C, M, target_lanes=1024, max_lanes=8192):
    """Pick r so W = r*C is a multiple of 128 lanes AND r divides M (no pad).

    Falls back to r=1 (W=C: block last dim == full array dim, legal but not
    lane dense) when no lane-dense r divides M.
    """
    r0 = 128 // math.gcd(C, 128)
    if M % r0 != 0:
        return 1, C
    k_budget = M // r0
    k_cap = max(1, max_lanes // (r0 * C))
    best_k = 1
    for k in range(1, k_cap + 1):
        if k_budget % k == 0:
            best_k = k
            if k * r0 * C >= target_lanes:
                break
    return r0 * best_k, r0 * best_k * C


class E3nnDropout:
    """JAX/Pallas equivalent of e3nn's Dropout(Rs, p) forward pass."""

    def __init__(self, Rs, p=0.5, min_pallas_bytes=1 << 20, block_bytes=4 << 20):
        # Rs convention: list of (mul, l). (Parity is irrelevant to dropout.)
        self.Rs = [(int(mul), int(l)) for mul, l in Rs]
        self.p = float(p)
        self.dim = sum(mul * (2 * l + 1) for mul, l in self.Rs)
        self.min_pallas_bytes = int(min_pallas_bytes)
        self.block_bytes = int(block_bytes)

    def _make_noise(self, key, batch):
        """Bernoulli(1-p)/(1-p) per (batch, mul), expanded across each 2l+1."""
        noises = []
        for mul, l in self.Rs:
            d = 2 * l + 1
            key, sub = jax.random.split(key)
            if self.p >= 1.0:
                unit = jnp.zeros((batch, mul), jnp.float32)
            elif self.p <= 0.0:
                unit = jnp.ones((batch, mul), jnp.float32)
            else:
                keep = jax.random.bernoulli(sub, 1.0 - self.p, (batch, mul))
                unit = keep.astype(jnp.float32) / jnp.float32(1.0 - self.p)
            # unsqueeze(2).expand(-1,-1,d).reshape(batch, mul*d) == repeat along channel
            noises.append(jnp.repeat(unit, d, axis=1))
        return jnp.concatenate(noises, axis=-1)  # (batch, C) float32

    def __call__(self, x, key, training=True, use_pallas=None):
        if not training:
            return x

        batch, C = x.shape[0], x.shape[-1]
        assert C == self.dim, f"channel dim {C} != sum(mul*(2l+1)) = {self.dim}"

        noise = self._make_noise(key, batch)  # (B, C) float32

        nbytes = x.size * jnp.dtype(x.dtype).itemsize
        if use_pallas is None:
            use_pallas = nbytes >= self.min_pallas_bytes
        if not use_pallas:
            # Tiny tensors: XLA's fused broadcast-multiply beats a pallas_call launch.
            bshape = (batch,) + (1,) * (x.ndim - 2) + (C,)
            return x * noise.reshape(bshape).astype(x.dtype)

        # ---------------- lane-dense flattened layout (no padding) ----------------
        M = int(x.size // (batch * C))          # flattened middle dims
        itemsize = jnp.dtype(x.dtype).itemsize
        sub = max(8, 32 // itemsize)            # native sublane tile: f32 8, bf16 16, i8 32

        r, W = _pick_row_width(C, M)
        rows = M // r                           # exact: r divides M (or r == 1)
        x3 = x.reshape(batch, rows, W)          # pure reshape, rows*W == M*C, no pad

        # Rows per block: ~block_bytes activation blocks; clamp to the full rows
        # dim when it is small (block dim == array dim is always legal).
        tm = max(sub, (self.block_bytes // (W * itemsize)) // sub * sub)
        if tm >= rows:
            tm = rows

        # Per-batch mask, tiled once to the row width (tiny: B x W), one (1,1,W)
        # block per batch index -- NOT batch-resident in VMEM.
        noise_row = jnp.tile(noise, (1, r)).astype(x.dtype).reshape(batch, 1, W)

        block_bytes = tm * W * itemsize
        needed = 4 * block_bytes + 4 * W * itemsize + (1 << 20)   # 2x in + 2x out + mask + headroom
        vmem_limit = int(min(max(needed, 20 << 20), 96 << 20))

        grid = (batch, pl.cdiv(rows, tm))       # ragged last block masked by Pallas
        out = pl.pallas_call(
            _dropout_mul_kernel,
            out_shape=jax.ShapeDtypeStruct((batch, rows, W), x.dtype),
            grid=grid,
            in_specs=[
                pl.BlockSpec((1, tm, W), lambda b, i: (b, i, 0)),
                pl.BlockSpec((1, 1, W), lambda b, i: (b, 0, 0)),   # changes only with b
            ],
            out_specs=pl.BlockSpec((1, tm, W), lambda b, i: (b, i, 0)),
            compiler_params=pltpu.CompilerParams(
                dimension_semantics=("parallel", "parallel"),
                vmem_limit_bytes=vmem_limit,
            ),
            cost_estimate=pl.CostEstimate(
                flops=int(x.size), transcendentals=0,
                bytes_accessed=int(2 * nbytes + noise_row.size * itemsize)),
        )(x3, noise_row)

        return out.reshape(x.shape)


if __name__ == "__main__":
    # Rs = [(mul, l)] -> channel = 4*1 + 2*3 + 1*5 = 15
    Rs = [(4, 0), (2, 1), (1, 2)]
    module = E3nnDropout(Rs, p=0.5)
    C = module.dim

    key = jax.random.PRNGKey(0)
    kx, knoise = jax.random.split(key)
    noise = module._make_noise(knoise, 2)  # (2, C) f32, same key -> identical mask

    # --- lane-dense path: M=256, r=128 divides M -> W=1920, no pad, no slice ---
    x = jax.random.normal(kx, (2, 16, 16, C), dtype=jnp.float32)
    out = jax.block_until_ready(module(x, knoise, training=True, use_pallas=True))
    ref = x * noise[:, None, None, :].astype(x.dtype)
    assert out.shape == x.shape and out.dtype == x.dtype
    assert jnp.allclose(out, ref, atol=1e-6, rtol=1e-6)

    # --- multiple row blocks + ragged last block (small block target) ---
    module_small = E3nnDropout(Rs, p=0.5, block_bytes=64 << 10)
    x2 = jax.random.normal(kx, (2, 2560, C), dtype=jnp.float32)  # rows=20, tm=8 -> cdiv=3
    out2 = jax.block_until_ready(module_small(x2, knoise, training=True, use_pallas=True))
    ref2 = x2 * noise[:, None, :].astype(x2.dtype)
    assert jnp.allclose(out2, ref2, atol=1e-6, rtol=1e-6)

    # --- fallback path: M=25 has no lane-dense divisor -> W=C, still no pad ---
    x3 = jax.random.normal(kx, (2, 5, 5, C), dtype=jnp.float32)
    out3 = jax.block_until_ready(module(x3, knoise, training=True, use_pallas=True))
    ref3 = x3 * noise[:, None, None, :].astype(x3.dtype)
    assert jnp.allclose(out3, ref3, atol=1e-6, rtol=1e-6)

    # --- auto dispatch (tiny tensor -> fused XLA path) must match too ---
    out_auto = jax.block_until_ready(module(x, knoise, training=True))
    assert jnp.allclose(out_auto, ref, atol=1e-6, rtol=1e-6)

    # --- eval mode is identity ---
    assert module(x, knoise, training=False) is x

    print("KERNEL_OK")
</pallas_src>

<mosaic_0001>
module attributes {stable_mosaic.version = 11 : i64} {
  func.func @_dropout_mul_kernel(%arg0: i32, %arg1: i32, %arg2: memref<1x2x1920xf32, #tpu.memory_space<vmem>>, %arg3: memref<1x1x1920xf32, #tpu.memory_space<vmem>>, %arg4: memref<1x2x1920xf32, #tpu.memory_space<vmem>>) attributes {dimension_semantics = [#tpu.dimension_semantics<parallel>, #tpu.dimension_semantics<parallel>], iteration_bounds = array<i64: 2, 1>, scalar_prefetch = 0 : i64, scratch_operands = 0 : i64, tpu.core_type = #tpu.core_type<tc>, window_params = [{transform_indices = @transform_0, window_bounds = array<i64: 1, 2, 1920>}, {transform_indices = @transform_1, window_bounds = array<i64: 1, 1, 1920>}, {transform_indices = @transform_2, window_bounds = array<i64: 1, 2, 1920>}]} {
    %c0 = arith.constant 0 : index
    %c0_0 = arith.constant 0 : index
    %c0_1 = arith.constant 0 : index
    %0 = vector.load %arg2[%c0, %c0_0, %c0_1] : memref<1x2x1920xf32, #tpu.memory_space<vmem>>, vector<1x2x1920xf32>
    %c0_2 = arith.constant 0 : index
    %c0_3 = arith.constant 0 : index
    %c0_4 = arith.constant 0 : index
    %1 = vector.load %arg3[%c0_2, %c0_3, %c0_4] : memref<1x1x1920xf32, #tpu.memory_space<vmem>>, vector<1x1x1920xf32>
    %2 = vector.broadcast %1 : vector<1x1x1920xf32> to vector<1x2x1920xf32>
    %3 = arith.mulf %0, %2 : vector<1x2x1920xf32>
    %c0_5 = arith.constant 0 : index
    %c0_6 = arith.constant 0 : index
    %c0_7 = arith.constant 0 : index
    %4 = vector.load %arg4[%c0_5, %c0_6, %c0_7] : memref<1x2x1920xf32, #tpu.memory_space<vmem>>, vector<1x2x1920xf32>
    tpu.vector_store %arg4[%c0_5, %c0_6, %c0_7], %3 {strides = array<i32>} : memref<1x2x1920xf32, #tpu.memory_space<vmem>>, vector<1x2x1920xf32>,
    return
  }
  func.func @transform_0(%arg0: i32, %arg1: i32) -> (i32, i32, i32) {
    %c0_i32 = arith.constant 0 : i32
    %c0_i32_0 = arith.constant 0 : i32
    return %arg0, %arg1, %c0_i32 : i32, i32, i32
  }
  func.func @transform_1(%arg0: i32, %arg1: i32) -> (i32, i32, i32) {
    %c0_i32 = arith.constant 0 : i32
    %c0_i32_0 = arith.constant 0 : i32
    %c0_i32_1 = arith.constant 0 : i32
    return %arg0, %c0_i32, %c0_i32_0 : i32, i32, i32
  }
  func.func @transform_2(%arg0: i32, %arg1: i32) -> (i32, i32, i32) {
    %c0_i32 = arith.constant 0 : i32
    %c0_i32_0 = arith.constant 0 : i32
    return %arg0, %arg1, %c0_i32 : i32, i32, i32
  }
}

</mosaic_0001>

<llo_original>
// kernel: tpu_custom_call.1
$region0: #{tpu_custom_call.1}
  #allocation0 [shape = 'u32[]', space=smem, size = 0x4, offset = 0x4, fixed_abs, tag = 'smem constant byte address 0x4 - core index']
  #allocation1 [shape = 'u32[144,128]{1,0:T(1,128)}', space=vmem, size = 0x12000, scoped, tag = 'internal scratch']
  %s0 = inlined_call_operand.hbm [shape: f32[2,2,1920], index: 0, kind: input, shape index: {}]
  %s1 = inlined_call_operand.hbm [shape: f32[2,1,1920], index: 1, kind: input, shape index: {}]
  %s2 = inlined_call_operand.hbm [shape: f32[2,2,1920], index: 2, kind: output, shape index: {}]
  %s3 = sld [smem:[#allocation0]]
  $region49: #{tpu_custom_call.1} parent=0
    _
  %s5 = ssub.s32 1, %s3
  %s6 = scalar_select 0, %s5, %s3
  $region1: #{tpu_custom_call.1} parent=0
    #allocation2 [shape = 'u8[30720]{0}', space=vmem, size = 0x7800, scoped, tag = 'input window, operand 0']
    #allocation3 [shape = 's32[2]{0}', space=sflag, size = 0x8, scoped, tag = 'scoped memory for tpu_custom_call.1']
    #allocation4 [shape = 's32[2]{0}', space=sflag, size = 0x8, scoped, tag = 'scoped memory for tpu_custom_call.1']
    #allocation5 [shape = 'u8[15360]{0}', space=vmem, size = 0x3c00, scoped, tag = 'input window, operand 1']
    #allocation6 [shape = 's32[2]{0}', space=sflag, size = 0x8, scoped, tag = 'scoped memory for tpu_custom_call.1']
    #allocation7 [shape = 'u8[30720]{0}', space=vmem, size = 0x7800, scoped, tag = 'output window, operand 0']
    %7 = vsyncpa [#allocation3], 0
    %s8 = scalar_lea.sflag [#allocation3], 1
    %9 = vsyncpa %s8, 0
    %10 = vsyncpa [#allocation6], 0
    %s11 = scalar_lea.sflag [#allocation6], 1
    %12 = vsyncpa %s11, 0
    %13 = vsyncpa [#allocation4], 0
    %s14 = scalar_lea.sflag [#allocation4], 1
    %15 = vsyncpa %s14, 0
    loop: start=0, step=1, limit=4
    $region2: #{tpu_custom_call.1} parent=1 // loop_pre_header
      _
    $region3: #{tpu_custom_call.1} parent=1 // loop_header
      %s17 = sphi 0, %s21
      %p18 = scmp.ge.s32.totalorder %s17, 4
      %s24 = sphi 0, %s36
      %s25 = sphi 0, %s32
      %s26 = sphi 0, %s24
      %s27 = sphi 0, %s25
      %s28 = sphi 0, %s26
      %s29 = sphi 0, %s27
      %s41 = sphi 0, %s43
      %s44 = sphi 0, %s41
      %s45 = sphi 0, %s44
      %s61 = sphi 0, %s45
      %s67 = sphi 0, %s69
      %s70 = sphi 0, %s67
      %s71 = sphi 0, %s70
      %s87 = sphi 0, %s71
      %s95 = sphi 0, %s97
      %s98 = sphi 0, %s95
      %s99 = sphi 0, %s98
      %s115 = sphi 0, %s99
    $region4: #{tpu_custom_call.1} parent=1 // loop_header_branch
      %20 = sbr.rel (%p18) target = $region8
    $region5: #{tpu_custom_call.1} parent=1 // loop_body
      %s22 = ssub.s32 %s17, 1
      %s23 = ssub.s32 %s17, 2
      %s30 = sadd.s32 1, %s25
      %p31 = scmp.ge.s32.totalorder %s30, 1
      %s32 = scalar_select %p31, 0, %s30
      %s33 = sadd.s32 1, %s24
      %s34 = scalar_select %p31, %s33, %s24
      %p35 = scmp.ge.s32.totalorder %s34, 2
      %s36 = scalar_select %p35, 0, %s34
      %s37 = ssub.s32 %s24, %s36
      %s38 = ssub.s32 %s25, %s32
      %s39 = sor.u32 %s37, %s38
      %p40 = scmp.eq.s32.totalorder %s39, 0
      %s42 = sadd.s32 %s41, 1
      %s43 = scalar_select %p40, %s41, %s42
      %p46 = pneg %p40
      %p47 = scmp.eq.s32.totalorder %s17, 1
      %p48 = por %p46, %p47
      %p49 = scmp.ne.s32.totalorder %s41, %s44
      %p50 = scmp.eq.s32.totalorder %s17, 0
      %p51 = por %p49, %p50
      %p52 = scmp.ne.s32.totalorder %s41, %s44
      %p53 = scmp.eq.s32.totalorder %s22, 1
      %p54 = por %p52, %p53
      %p55 = scmp.ne.s32.totalorder %s44, %s45
      %p56 = scmp.eq.s32.totalorder %s22, 0
      %p57 = por %p55, %p56
      %p58 = scmp.ne.s32.totalorder %s44, %s45
      %p59 = scmp.eq.s32.totalorder %s23, 1
      %p60 = por %p58, %p59
      %p62 = scmp.ne.s32.totalorder %s45, %s61
      %p63 = scmp.eq.s32.totalorder %s23, 0
      %p64 = por %p62, %p63
      %s65 = ssub.s32 %s24, %s36
      %p66 = scmp.eq.s32.totalorder %s65, 0
      %s68 = sadd.s32 %s67, 1
      %s69 = scalar_select %p66, %s67, %s68
      %p72 = pneg %p66
      %p73 = scmp.eq.s32.totalorder %s17, 1
      %p74 = por %p72, %p73
      %p75 = scmp.ne.s32.totalorder %s67, %s70
      %p76 = scmp.eq.s32.totalorder %s17, 0
      %p77 = por %p75, %p76
      %p78 = scmp.ne.s32.totalorder %s67, %s70
      %p79 = scmp.eq.s32.totalorder %s22, 1
      %p80 = por %p78, %p79
      %p81 = scmp.ne.s32.totalorder %s70, %s71
      %p82 = scmp.eq.s32.totalorder %s22, 0
      %p83 = por %p81, %p82
      %p84 = scmp.ne.s32.totalorder %s70, %s71
      %p85 = scmp.eq.s32.totalorder %s23, 1
      %p86 = por %p84, %p85
      %p88 = scmp.ne.s32.totalorder %s71, %s87
      %p89 = scmp.eq.s32.totalorder %s23, 0
      %p90 = por %p88, %p89
      %s91 = ssub.s32 %s24, %s36
      %s92 = ssub.s32 %s25, %s32
      %s93 = sor.u32 %s91, %s92
      %p94 = scmp.eq.s32.totalorder %s93, 0
      %s96 = sadd.s32 %s95, 1
      %s97 = scalar_select %p94, %s95, %s96
      %p100 = pneg %p94
      %p101 = scmp.eq.s32.totalorder %s17, 1
      %p102 = por %p100, %p101
      %p103 = scmp.ne.s32.totalorder %s95, %s98
      %p104 = scmp.eq.s32.totalorder %s17, 0
      %p105 = por %p103, %p104
      %p106 = scmp.ne.s32.totalorder %s95, %s98
      %p107 = scmp.eq.s32.totalorder %s22, 1
      %p108 = por %p106, %p107
      %p109 = scmp.ne.s32.totalorder %s98, %s99
      %p110 = scmp.eq.s32.totalorder %s22, 0
      %p111 = por %p109, %p110
      %p112 = scmp.ne.s32.totalorder %s98, %s99
      %p113 = scmp.eq.s32.totalorder %s23, 1
      %p114 = por %p112, %p113
      %p116 = scmp.ne.s32.totalorder %s99, %s115
      %p117 = scmp.eq.s32.totalorder %s23, 0
      %p118 = por %p116, %p117
      %p119 = scmp.le.s32.totalorder 1, %s17
      %p120 = scmp.lt.s32.totalorder %s17, 3
      %p121 = pnand %p119, %p120
      %p122 = pneg %p121
      // Predicated region
      $region9: #{tpu_custom_call.1} parent=5 // pred_check
        _
      $region10: #{tpu_custom_call.1} parent=5 // pred_check_branch
        %124 = sbr.rel (%p121) target = $region12
      $region11: #{tpu_custom_call.1} parent=5 // pred_region
        %s125 = ssub.s32 %s17, 1
      $region12: #{tpu_custom_call.1} parent=5 // pred_fallthru
        _
      %p126 = scmp.lt.s32.totalorder %s17, 2
      // Predicated region
      $region13: #{tpu_custom_call.1} parent=5 // pred_check
        %p127 = pneg %p126
      $region14: #{tpu_custom_call.1} parent=5 // pred_check_branch
        %129 = sbr.rel (%p127) target = $region16
      $region15: #{tpu_custom_call.1} parent=5 // pred_region
        // Predicated region
        $region17: #{tpu_custom_call.1} parent=15 // pred_check
          %p130 = pneg %p51
        $region18: #{tpu_custom_call.1} parent=15 // pred_check_branch
          %132 = sbr.rel (%p130) target = $region20
        $region19: #{tpu_custom_call.1} parent=15 // pred_region
          %s133 = sand.u32 %s41, 1
          %s134 = scalar_lea.sflag [#allocation3], %s133
          %s135 = sand.u32 %s41, 1
          %s136 = smul.addr %s135, 30
          %s137 = scalar_lea.vmem [#allocation2], %s136
          %s139 = ssub.s32 480, 480
          %140 = vsyncadd %s134, %s139
          %s141 = smul.addr %s25, 15
          %s142 = smul.addr %s24, 15
          %s143 = sadd.s32 %s141, %s142
          %s144 = smul.addr %s143, 32
          %s145 = scalar_lea.hbm %s0, %s144
          %s147 = sshll.u32 %s137, 4
          %s148 = int_to_ptr.vmem [resolvable:$true] %s147
          %150 = dma.hbm_to_vmem [thread:$0]  %s145, 480, %s148, %s134
        $region20: #{tpu_custom_call.1} parent=15 // pred_fallthru
          _
        // Predicated region
        $region21: #{tpu_custom_call.1} parent=15 // pred_check
          %p151 = pneg %p77
        $region22: #{tpu_custom_call.1} parent=15 // pred_check_branch
          %153 = sbr.rel (%p151) target = $region24
        $region23: #{tpu_custom_call.1} parent=15 // pred_region
          %s154 = sand.u32 %s67, 1
          %s155 = scalar_lea.sflag [#allocation6], %s154
          %s156 = sand.u32 %s67, 1
          %s157 = smul.addr %s156, 15
          %s158 = scalar_lea.vmem [#allocation5], %s157
          %s160 = ssub.s32 240, 240
          %161 = vsyncadd %s155, %s160
          %s162 = smul.addr %s24, 15
          %s163 = smul.addr %s162, 16
          %s164 = scalar_lea.hbm %s1, %s163
          %s166 = sshll.u32 %s158, 4
          %s167 = int_to_ptr.vmem [resolvable:$true] %s166
          %169 = dma.hbm_to_vmem [thread:$0]  %s164, 240, %s167, %s155
        $region24: #{tpu_custom_call.1} parent=15 // pred_fallthru
          _
      $region16: #{tpu_custom_call.1} parent=5 // pred_fallthru
        _
      %p170 = scmp.le.s32.totalorder 1, %s17
      %p171 = scmp.lt.s32.totalorder %s17, 3
      %p172 = pnand %p170, %p171
      %p173 = pneg %p172
      // Predicated region
      $region25: #{tpu_custom_call.1} parent=5 // pred_check
        _
      $region26: #{tpu_custom_call.1} parent=5 // pred_check_branch
        %175 = sbr.rel (%p172) target = $region28
      $region27: #{tpu_custom_call.1} parent=5 // pred_region
        %s176 = ssub.s32 %s17, 1
        %s177 = sand.u32 %s44, 1
        %s178 = scalar_lea.sflag [#allocation3], %s177
        %s179 = sand.u32 %s44, 1
        %s180 = smul.addr %s179, 30
        %s181 = scalar_lea.vmem [#allocation2], %s180
        // Predicated region
        $region29: #{tpu_custom_call.1} parent=27 // pred_check
          %p182 = pneg %p57
        $region30: #{tpu_custom_call.1} parent=27 // pred_check_branch
          %184 = sbr.rel (%p182) target = $region32
        $region31: #{tpu_custom_call.1} parent=27 // pred_region
          %185 = dma.done %s178, 480
        $region32: #{tpu_custom_call.1} parent=27 // pred_fallthru
          _
        %s186 = sand.u32 %s70, 1
        %s187 = scalar_lea.sflag [#allocation6], %s186
        %s188 = sand.u32 %s70, 1
        %s189 = smul.addr %s188, 15
        %s190 = scalar_lea.vmem [#allocation5], %s189
        // Predicated region
        $region33: #{tpu_custom_call.1} parent=27 // pred_check
          %p191 = pneg %p83
        $region34: #{tpu_custom_call.1} parent=27 // pred_check_branch
          %193 = sbr.rel (%p191) target = $region36
        $region35: #{tpu_custom_call.1} parent=27 // pred_region
          %194 = dma.done %s187, 240
        $region36: #{tpu_custom_call.1} parent=27 // pred_fallthru
          _
        %s195 = sand.u32 %s44, 1
        %s196 = scalar_lea.sflag [#allocation3], %s195
        %s197 = sand.u32 %s44, 1
        %s198 = smul.addr %s197, 30
        %s199 = scalar_lea.vmem [#allocation2], %s198
        %p200 = pneg %p57
        %p201 = pneg %p54
        %s202 = sand.u32 %s70, 1
        %s203 = scalar_lea.sflag [#allocation6], %s202
        %s204 = sand.u32 %s70, 1
        %s205 = smul.addr %s204, 15
        %s206 = scalar_lea.vmem [#allocation5], %s205
        %p207 = pneg %p83
        %p208 = pneg %p80
        %p209 = pneg %p111
        %p210 = pneg %p108
        %s211 = sand.u32 %s98, 1
        %s212 = scalar_lea.sflag [#allocation4], %s211
        %s213 = sand.u32 %s98, 1
        %s214 = smul.addr %s213, 30
        %s215 = scalar_lea.vmem [#allocation7], %s214
        %v216 = vld [vmem:[%s181] sm:$0xff]
        %v217 = vld [vmem:[%s181 + $0x8] sm:$0xff]
        %v218 = vld [vmem:[%s181 + $0x10] sm:$0xff]
        %v219 = vld [vmem:[%s181 + $0x18] sm:$0x3f]
        %v220 = vld [vmem:[%s190] sm:$0xff]
        %v221 = vld [vmem:[%s190 + $0x8] sm:$0xff]
        %v224 = vlaneseq
        %v225 = vshrl.u32 %v224, 7
        %v226 = vsub.s32 0, %v225
        %v227 = vrot.slane %v220, %v226
        %v228 = vlaneseq
        %v229 = vshrl.u32 %v228, 7
        %v230 = vsub.s32 1, %v229
        %v231 = vrot.slane %v220, %v230
        %v232 = vlaneseq
        %v233 = vshrl.u32 %v232, 7
        %v234 = vsub.s32 2, %v233
        %v235 = vrot.slane %v220, %v234
        %v236 = vlaneseq
        %v237 = vshrl.u32 %v236, 7
        %v238 = vsub.s32 3, %v237
        %v239 = vrot.slane %v220, %v238
        %v240 = vlaneseq
        %v241 = vshrl.u32 %v240, 7
        %v242 = vsub.s32 4, %v241
        %v243 = vrot.slane %v220, %v242
        %v244 = vlaneseq
        %v245 = vshrl.u32 %v244, 7
        %v246 = vsub.s32 5, %v245
        %v247 = vrot.slane %v220, %v246
        %v248 = vlaneseq
        %v249 = vshrl.u32 %v248, 7
        %v250 = vsub.s32 6, %v249
        %v251 = vrot.slane %v220, %v250
        %v252 = vlaneseq
        %v253 = vshrl.u32 %v252, 7
        %v254 = vsub.s32 7, %v253
        %v255 = vrot.slane %v220, %v254
        %v256 = vlaneseq
        %v257 = vshrl.u32 %v256, 7
        %v258 = vsub.s32 0, %v257
        %v259 = vrot.slane %v221, %v258
        %v260 = vlaneseq
        %v261 = vshrl.u32 %v260, 7
        %v262 = vsub.s32 1, %v261
        %v263 = vrot.slane %v221, %v262
        %v264 = vlaneseq
        %v265 = vshrl.u32 %v264, 7
        %v266 = vsub.s32 2, %v265
        %v267 = vrot.slane %v221, %v266
        %v268 = vlaneseq
        %v269 = vshrl.u32 %v268, 7
        %v270 = vsub.s32 3, %v269
        %v271 = vrot.slane %v221, %v270
        %v272 = vlaneseq
        %v273 = vshrl.u32 %v272, 7
        %v274 = vsub.s32 4, %v273
        %v275 = vrot.slane %v221, %v274
        %v276 = vlaneseq
        %v277 = vshrl.u32 %v276, 7
        %v278 = vsub.s32 5, %v277
        %v279 = vrot.slane %v221, %v278
        %v280 = vlaneseq
        %v281 = vshrl.u32 %v280, 7
        %v282 = vsub.s32 6, %v281
        %v283 = vrot.slane %v221, %v282
        %v284 = vcombine.low %v227, %v231
        %v285 = vcombine.low %v235, %v239
        %v287 = vunpack.c.l.s4 1983009808
        %v288 = vunpack.c.0.s8 %v287
        %v289 = vlaneseq
        %v290 = vshrl.u32 %v289, 7
        %v291 = vsub.s32 %v288, %v290
        %v292 = vrot.slane %v284, %v291
        %v294 = vunpack.c.l.s4 1983009808
        %v295 = vunpack.c.0.s8 %v294
        %v296 = vlaneseq
        %v297 = vshrl.u32 %v296, 7
        %v298 = vsub.s32 %v295, %v297
        %v299 = vrot.slane %v285, %v298
        %v300 = vcombine.low %v292, %v299
        %v301 = vcombine.low %v243, %v247
        %v302 = vcombine.low %v251, %v255
        %v304 = vunpack.c.l.s4 1983009808
        %v305 = vunpack.c.0.s8 %v304
        %v306 = vlaneseq
        %v307 = vshrl.u32 %v306, 7
        %v308 = vsub.s32 %v305, %v307
        %v309 = vrot.slane %v301, %v308
        %v311 = vunpack.c.l.s4 1983009808
        %v312 = vunpack.c.0.s8 %v311
        %v313 = vlaneseq
        %v314 = vshrl.u32 %v313, 7
        %v315 = vsub.s32 %v312, %v314
        %v316 = vrot.slane %v302, %v315
        %v317 = vcombine.low %v309, %v316
        %v318 = vcombine.low %v259, %v263
        %v319 = vcombine.low %v267, %v271
        %v321 = vunpack.c.l.s4 1983009808
        %v322 = vunpack.c.0.s8 %v321
        %v323 = vlaneseq
        %v324 = vshrl.u32 %v323, 7
        %v325 = vsub.s32 %v322, %v324
        %v326 = vrot.slane %v318, %v325
        %v328 = vunpack.c.l.s4 1983009808
        %v329 = vunpack.c.0.s8 %v328
        %v330 = vlaneseq
        %v331 = vshrl.u32 %v330, 7
        %v332 = vsub.s32 %v329, %v331
        %v333 = vrot.slane %v319, %v332
        %v334 = vcombine.low %v326, %v333
        %v335 = vcombine.low %v275, %v279
        %v337 = vunpack.c.l.s4 1983009808
        %v338 = vunpack.c.0.s8 %v337
        %v339 = vlaneseq
        %v340 = vshrl.u32 %v339, 7
        %v341 = vsub.s32 %v338, %v340
        %v342 = vrot.slane %v335, %v341
        %v344 = vunpack.c.l.s4 1983009808
        %v345 = vunpack.c.0.s8 %v344
        %v346 = vlaneseq
        %v347 = vshrl.u32 %v346, 7
        %v348 = vsub.s32 %v345, %v347
        %v349 = vrot.slane %v283, %v348
        %v350 = vcombine.low %v342, %v349
        %v355 = vmul.f32 %v216, %v300
        %v356 = vmul.f32 %v217, %v317
        %v357 = vmul.f32 %v218, %v334
        %v358 = vmul.f32 %v219, %v350
        %359 = vst [vmem:[%s215] sm:$0xff] %v355
        %360 = vst [vmem:[%s215 + $0x8] sm:$0xff] %v356
        %361 = vst [vmem:[%s215 + $0x10] sm:$0xff] %v357
        %362 = vst [vmem:[%s215 + $0x18] sm:$0x3f] %v358
        %s363 = sand.u32 %s98, 1
        %s364 = scalar_lea.sflag [#allocation4], %s363
        %s365 = sand.u32 %s98, 1
        %s366 = smul.addr %s365, 30
        %s367 = scalar_lea.vmem [#allocation7], %s366
        // Predicated region
        $region37: #{tpu_custom_call.1} parent=27 // pred_check
          %p368 = pneg %p108
        $region38: #{tpu_custom_call.1} parent=27 // pred_check_branch
          %370 = sbr.rel (%p368) target = $region40
        $region39: #{tpu_custom_call.1} parent=27 // pred_region
          %s372 = ssub.s32 480, 480
          %373 = vsyncadd %s364, %s372
          %s374 = smul.addr %s27, 15
          %s375 = smul.addr %s26, 15
          %s376 = sadd.s32 %s374, %s375
          %s377 = smul.addr %s376, 32
          %s378 = scalar_lea.hbm %s2, %s377
          %s380 = sshll.u32 %s367, 4
          %s381 = int_to_ptr.vmem [resolvable:$true] %s380
          %383 = dma.vmem_to_hbm [thread:$0]  %s381, 480, %s378, %s364
        $region40: #{tpu_custom_call.1} parent=27 // pred_fallthru
          _
      $region28: #{tpu_custom_call.1} parent=5 // pred_fallthru
        _
      %p384 = scmp.le.s32.totalorder 2, %s17
      // Predicated region
      $region41: #{tpu_custom_call.1} parent=5 // pred_check
        %p385 = pneg %p384
      $region42: #{tpu_custom_call.1} parent=5 // pred_check_branch
        %387 = sbr.rel (%p385) target = $region44
      $region43: #{tpu_custom_call.1} parent=5 // pred_region
        %s388 = ssub.s32 %s17, 2
        // Predicated region
        $region45: #{tpu_custom_call.1} parent=43 // pred_check
          %p389 = pneg %p114
        $region46: #{tpu_custom_call.1} parent=43 // pred_check_branch
          %391 = sbr.rel (%p389) target = $region48
        $region47: #{tpu_custom_call.1} parent=43 // pred_region
          %s392 = sand.u32 %s99, 1
          %s393 = scalar_lea.sflag [#allocation4], %s392
          %s394 = sand.u32 %s99, 1
          %s395 = smul.addr %s394, 30
          %s396 = scalar_lea.vmem [#allocation7], %s395
          %397 = dma.done %s393, 480
        $region48: #{tpu_custom_call.1} parent=43 // pred_fallthru
          _
      $region44: #{tpu_custom_call.1} parent=5 // pred_fallthru
        _
    $region6: #{tpu_custom_call.1} parent=1 // loop_footer
      %s21 = sadd.s32 1, %s17
    $region7: #{tpu_custom_call.1} parent=1 // loop_footer_branch
      %16 = sbr.rel target = $region3
    $region8: #{tpu_custom_call.1} parent=1 // loop_exit
      _
    %398 = vsyncpa [#allocation3], 1
    %s399 = scalar_lea.sflag [#allocation3], 1
    %400 = vsyncpa %s399, 1
    %401 = vsyncpa [#allocation6], 1
    %s402 = scalar_lea.sflag [#allocation6], 1
    %403 = vsyncpa %s402, 1
    %404 = vsyncpa [#allocation4], 1
    %s405 = scalar_lea.sflag [#allocation4], 1
    %406 = vsyncpa %s405, 1

</llo_original>
